<compile_context>
chip_gen: v7x
topology: tpu7x:2x2x1
jax: 0.10.0
libtpu: 0.0.40
codegen_flags: <defaults>
</compile_context>

<pallas_src>
import functools
import math

import jax
import jax.numpy as jnp
from jax.experimental import pallas as pl
from jax.experimental.pallas import tpu as pltpu


def _round_up(x, m):
    return ((x + m - 1) // m) * m


def _gelu_exact(x):
    # PyTorch nn.GELU() default = erf-based ("exact") GELU.
    return 0.5 * x * (1.0 + jax.lax.erf(x * (1.0 / math.sqrt(2.0))))


def encoder_kernel(lr_ref, x_ref, w1_ref, b1_ref, w2_ref, b2_ref, out_ref):
    n = pl.program_id(1)

    @pl.when(n == 0)
    def _():
        out_ref[...] = jnp.zeros_like(out_ref)

    # Linear(H, 2H) slab + exact GELU.  bf16 operands, f32 MXU accumulation.
    h = jnp.dot(x_ref[...], w1_ref[...], preferred_element_type=jnp.float32)
    h = _gelu_exact(h + b1_ref[...])

    # Accumulate this hidden slab's contribution to Linear(2H, H).
    part = jnp.dot(h.astype(w2_ref.dtype), w2_ref[...],
                   preferred_element_type=jnp.float32)
    out_ref[...] += part.astype(out_ref.dtype)

    @pl.when(n == pl.num_programs(1) - 1)
    def _():
        y = (out_ref[...].astype(jnp.float32) + b2_ref[...]) * lr_ref[0, 0]
        out_ref[...] = y.astype(out_ref.dtype)


@functools.cache
def _vmem_budget_bytes():
    """~75% of per-core VMEM: ~48 MiB on v7x, ~96 MiB on v5e/v6e."""
    try:
        cap = int(pltpu.get_tpu_info().vmem_capacity_bytes)
    except Exception:
        cap = 64 << 20  # conservative: v7x per-TensorCore VMEM
    return max(cap - cap // 4, 16 << 20)


def _pick_tiles(B, Hp, H2p, budget):
    """Choose (batch tile TB, hidden-slab tile TN) fitting the VMEM budget."""
    d = H2p // 128
    valid_tn = sorted(128 * m for m in range(1, d + 1) if d % m == 0)
    big = [t for t in valid_tn if t <= 1024]
    TN = max(big) if big else valid_tn[0]
    TB = min(_round_up(B, 16), 512)     # 16: keep bf16 sublane packing happy

    def footprint(tb, tn):
        x_t = 2 * tb * Hp * 2           # bf16 x tile, double-buffered
        o_t = 2 * tb * Hp * 4           # f32 output/accumulator, double-buffered
        w1_t = 2 * Hp * tn * 2          # bf16 W1 slab, double-buffered
        w2_t = 2 * tn * Hp * 2          # bf16 W2 slab, double-buffered
        b_t = 2 * tn * 4 + Hp * 4       # b1 slabs + single-buffered b2
        h_t = tb * tn * (4 + 2)         # f32 GELU slab + bf16 copy for 2nd dot
        return x_t + o_t + w1_t + w2_t + b_t + h_t

    while footprint(TB, TN) > budget:
        if TB > 256:
            TB = 256
        elif TB > 128:
            TB = 128
        else:
            smaller = [t for t in valid_tn if t < TN]
            if not smaller:
                break
            TN = max(smaller)
    return TB, TN


def prepare_params(params):
    """Pad feature dims to lane multiples and cast weights to bf16 ONCE."""
    H, H2 = params["w1"].shape
    Hp, H2p = _round_up(H, 128), _round_up(H2, 128)
    f32, bf16 = jnp.float32, jnp.bfloat16
    w1 = jnp.pad(params["w1"].astype(f32), ((0, Hp - H), (0, H2p - H2))).astype(bf16)
    b1 = jnp.pad(params["b1"].astype(f32).reshape(1, -1), ((0, 0), (0, H2p - H2)))
    w2 = jnp.pad(params["w2"].astype(f32), ((0, H2p - H2), (0, Hp - H))).astype(bf16)
    b2 = jnp.pad(params["b2"].astype(f32).reshape(1, -1), ((0, 0), (0, Hp - H)))
    return dict(w1=w1, b1=b1, w2=w2, b2=b2)


@jax.jit
def unsupervised_learner_forward(x, learning_rate, prepared):
    """x: [B, H] f32, learning_rate: scalar, prepared: prepare_params(params)."""
    B, H = x.shape
    w1, b1, w2, b2 = prepared["w1"], prepared["b1"], prepared["w2"], prepared["b2"]
    Hp, H2p = w1.shape

    budget = _vmem_budget_bytes()
    TB, TN = _pick_tiles(B, Hp, H2p, budget)
    Bp = _round_up(B, TB)
    grid = (Bp // TB, H2p // TN)

    # Only x is padded per call (data-dependent); weights were padded at init.
    x_p = jnp.pad(x.astype(jnp.float32), ((0, Bp - B), (0, Hp - H))).astype(jnp.bfloat16)
    lr = jnp.asarray(learning_rate, jnp.float32).reshape(1, 1)

    cost = pl.CostEstimate(
        flops=4 * Bp * Hp * H2p,                       # two matmuls
        transcendentals=Bp * H2p,                      # erf per hidden element
        bytes_accessed=int(x_p.size * 2 + Bp * Hp * 4
                           + grid[0] * (w1.size + w2.size) * 2
                           + (b1.size + b2.size) * 4),
    )

    out_p = pl.pallas_call(
        encoder_kernel,
        out_shape=jax.ShapeDtypeStruct((Bp, Hp), x.dtype),
        grid=grid,
        in_specs=[
            pl.BlockSpec((1, 1), lambda i, n: (0, 0),
                         memory_space=pltpu.MemorySpace.SMEM),      # lr scalar
            pl.BlockSpec((TB, Hp), lambda i, n: (i, 0)),            # x tile
            pl.BlockSpec((Hp, TN), lambda i, n: (0, n)),            # W1 slab
            pl.BlockSpec((1, TN), lambda i, n: (0, n)),             # b1 slab
            pl.BlockSpec((TN, Hp), lambda i, n: (n, 0)),            # W2 slab
            pl.BlockSpec((1, Hp), lambda i, n: (0, 0),
                         pipeline_mode=pl.Buffered(1)),             # b2 (resident)
        ],
        out_specs=pl.BlockSpec((TB, Hp), lambda i, n: (i, 0)),      # accumulator
        compiler_params=pltpu.CompilerParams(
            dimension_semantics=("parallel", "arbitrary"),
            vmem_limit_bytes=int(budget),
        ),
        cost_estimate=cost,
    )(lr, x_p, w1, b1, w2, b2)

    return out_p[:B, :H]


def init_params(key, hidden_dim):
    """Deterministic synthetic init (Kaiming-uniform-ish like nn.Linear)."""
    H, H2 = hidden_dim, hidden_dim * 2
    ks = jax.random.split(key, 4)

    def lin(kw, kb, fan_in, fan_out):
        bound = 1.0 / math.sqrt(fan_in)
        w = jax.random.uniform(kw, (fan_in, fan_out), jnp.float32, -bound, bound)
        b = jax.random.uniform(kb, (1, fan_out), jnp.float32, -bound, bound)
        return w, b

    w1, b1 = lin(ks[0], ks[1], H, H2)
    w2, b2 = lin(ks[2], ks[3], H2, H)
    return dict(w1=w1, b1=b1, w2=w2, b2=b2)


def reference_forward(x, lr, params):
    def gelu(v):
        return 0.5 * v * (1.0 + jax.lax.erf(v / jnp.sqrt(2.0)))
    h = gelu(x @ params["w1"] + params["b1"])
    y = h @ params["w2"] + params["b2"]
    return y * lr


if __name__ == "__main__":
    B, H = 8, 32          # batch, hidden_dim (small test shapes)

    key = jax.random.PRNGKey(0)
    k_x, k_params = jax.random.split(key)

    x = jax.random.normal(k_x, (B, H), jnp.float32)
    learning_rate = jnp.float32(0.01)
    params = init_params(k_params, H)
    prepared = prepare_params(params)   # pad + bf16-cast once, outside hot path

    out = unsupervised_learner_forward(x, learning_rate, prepared)
    jax.block_until_ready(out)

    ref = reference_forward(x, learning_rate, params)
    assert out.shape == (B, H)
    # bf16 matmul operands (f32 accumulation) -> loose-but-meaningful tolerance.
    max_err = float(jnp.max(jnp.abs(out - ref)))
    assert jnp.allclose(out, ref, atol=1e-3, rtol=3e-2), f"max_abs_err={max_err}"

    print("KERNEL_OK")
</pallas_src>

<mosaic_0001>
module attributes {stable_mosaic.version = 11 : i64} {
  func.func @encoder_kernel(%arg0: i32, %arg1: i32, %arg2: memref<1x1xf32, #tpu.memory_space<smem>>, %arg3: memref<16x128xbf16, #tpu.memory_space<vmem>>, %arg4: memref<128x128xbf16, #tpu.memory_space<vmem>>, %arg5: memref<1x128xf32, #tpu.memory_space<vmem>>, %arg6: memref<128x128xbf16, #tpu.memory_space<vmem>>, %arg7: memref<1x128xf32, #tpu.memory_space<vmem>>, %arg8: memref<16x128xf32, #tpu.memory_space<vmem>>) attributes {dimension_semantics = [#tpu.dimension_semantics<parallel>, #tpu.dimension_semantics<arbitrary>], iteration_bounds = array<i64: 1, 1>, scalar_prefetch = 0 : i64, scratch_operands = 0 : i64, tpu.core_type = #tpu.core_type<tc>, window_params = [{transform_indices = @transform_0, window_bounds = array<i64: 1, 1>}, {transform_indices = @transform_1, window_bounds = array<i64: 16, 128>}, {transform_indices = @transform_2, window_bounds = array<i64: 128, 128>}, {transform_indices = @transform_3, window_bounds = array<i64: 1, 128>}, {transform_indices = @transform_4, window_bounds = array<i64: 128, 128>}, {pipeline_mode = #tpu.pipeline_mode<synchronous>, transform_indices = @transform_5, window_bounds = array<i64: 1, 128>}, {transform_indices = @transform_6, window_bounds = array<i64: 16, 128>}]} {
    %c0_i32 = arith.constant 0 : i32
    %0 = arith.cmpi eq, %arg1, %c0_i32 : i32
    %1 = arith.extui %0 : i1 to i32
    %c0_i32_0 = arith.constant 0 : i32
    %2 = arith.cmpi ne, %1, %c0_i32_0 : i32
    scf.if %2 {
      %cst_18 = arith.constant 0.000000e+00 : f32
      %26 = vector.broadcast %cst_18 : f32 to vector<16x128xf32>
      %c0_19 = arith.constant 0 : index
      %c0_20 = arith.constant 0 : index
      %27 = vector.load %arg8[%c0_19, %c0_20] : memref<16x128xf32, #tpu.memory_space<vmem>>, vector<16x128xf32>
      tpu.vector_store %arg8[%c0_19, %c0_20], %26 {strides = array<i32>} : memref<16x128xf32, #tpu.memory_space<vmem>>, vector<16x128xf32>,
    } else {
    }
    %c0 = arith.constant 0 : index
    %c0_1 = arith.constant 0 : index
    %3 = vector.load %arg3[%c0, %c0_1] : memref<16x128xbf16, #tpu.memory_space<vmem>>, vector<16x128xbf16>
    %c0_2 = arith.constant 0 : index
    %c0_3 = arith.constant 0 : index
    %4 = vector.load %arg4[%c0_2, %c0_3] : memref<128x128xbf16, #tpu.memory_space<vmem>>, vector<128x128xbf16>
    %cst = arith.constant dense<0.000000e+00> : vector<16x128xf32>
    %5 = tpu.matmul %3, %4, %cst {dimension_numbers = #tpu.dot_dimension_numbers<[1], [0], [0], [1], [0, 0, 1, 1], [], []>} : vector<16x128xbf16>, vector<128x128xbf16>, vector<16x128xf32> -> vector<16x128xf32>
    %c0_4 = arith.constant 0 : index
    %c0_5 = arith.constant 0 : index
    %6 = vector.load %arg5[%c0_4, %c0_5] : memref<1x128xf32, #tpu.memory_space<vmem>>, vector<1x128xf32>
    %7 = vector.broadcast %6 : vector<1x128xf32> to vector<16x128xf32>
    %8 = arith.addf %5, %7 : vector<16x128xf32>
    %cst_6 = arith.constant 5.000000e-01 : f32
    %9 = vector.broadcast %cst_6 : f32 to vector<16x128xf32>
    %10 = arith.mulf %9, %8 : vector<16x128xf32>
    %cst_7 = arith.constant 0.707106769 : f32
    %11 = vector.broadcast %cst_7 : f32 to vector<16x128xf32>
    %12 = arith.mulf %8, %11 : vector<16x128xf32>
    %13 = math.erf %12 : vector<16x128xf32>
    %cst_8 = arith.constant 1.000000e+00 : f32
    %14 = vector.broadcast %cst_8 : f32 to vector<16x128xf32>
    %15 = arith.addf %14, %13 : vector<16x128xf32>
    %16 = arith.mulf %10, %15 : vector<16x128xf32>
    %17 = arith.truncf %16 : vector<16x128xf32> to vector<16x128xbf16>
    %c0_9 = arith.constant 0 : index
    %c0_10 = arith.constant 0 : index
    %18 = vector.load %arg6[%c0_9, %c0_10] : memref<128x128xbf16, #tpu.memory_space<vmem>>, vector<128x128xbf16>
    %cst_11 = arith.constant dense<0.000000e+00> : vector<16x128xf32>
    %19 = tpu.matmul %17, %18, %cst_11 {dimension_numbers = #tpu.dot_dimension_numbers<[1], [0], [0], [1], [0, 0, 1, 1], [], []>} : vector<16x128xbf16>, vector<128x128xbf16>, vector<16x128xf32> -> vector<16x128xf32>
    %c0_12 = arith.constant 0 : index
    %c0_13 = arith.constant 0 : index
    %20 = vector.load %arg8[%c0_12, %c0_13] : memref<16x128xf32, #tpu.memory_space<vmem>>, vector<16x128xf32>
    %21 = arith.addf %20, %19 : vector<16x128xf32>
    %c0_14 = arith.constant 0 : index
    %c0_15 = arith.constant 0 : index
    %22 = vector.load %arg8[%c0_14, %c0_15] : memref<16x128xf32, #tpu.memory_space<vmem>>, vector<16x128xf32>
    tpu.vector_store %arg8[%c0_14, %c0_15], %21 {strides = array<i32>} : memref<16x128xf32, #tpu.memory_space<vmem>>, vector<16x128xf32>,
    %c0_i32_16 = arith.constant 0 : i32
    %23 = arith.cmpi eq, %arg1, %c0_i32_16 : i32
    %24 = arith.extui %23 : i1 to i32
    %c0_i32_17 = arith.constant 0 : i32
    %25 = arith.cmpi ne, %24, %c0_i32_17 : i32
    scf.if %25 {
      %c0_18 = arith.constant 0 : index
      %c0_19 = arith.constant 0 : index
      %26 = vector.load %arg8[%c0_18, %c0_19] : memref<16x128xf32, #tpu.memory_space<vmem>>, vector<16x128xf32>
      %c0_20 = arith.constant 0 : index
      %c0_21 = arith.constant 0 : index
      %27 = vector.load %arg7[%c0_20, %c0_21] : memref<1x128xf32, #tpu.memory_space<vmem>>, vector<1x128xf32>
      %28 = vector.broadcast %27 : vector<1x128xf32> to vector<16x128xf32>
      %29 = arith.addf %26, %28 : vector<16x128xf32>
      %c0_22 = arith.constant 0 : index
      %c0_23 = arith.constant 0 : index
      %30 = memref.load %arg2[%c0_22, %c0_23] : memref<1x1xf32, #tpu.memory_space<smem>>
      %31 = vector.broadcast %30 : f32 to vector<16x128xf32>
      %32 = arith.mulf %29, %31 : vector<16x128xf32>
      %c0_24 = arith.constant 0 : index
      %c0_25 = arith.constant 0 : index
      %33 = vector.load %arg8[%c0_24, %c0_25] : memref<16x128xf32, #tpu.memory_space<vmem>>, vector<16x128xf32>
      tpu.vector_store %arg8[%c0_24, %c0_25], %32 {strides = array<i32>} : memref<16x128xf32, #tpu.memory_space<vmem>>, vector<16x128xf32>,
    } else {
    }
    return
  }
  func.func @transform_0(%arg0: i32, %arg1: i32) -> (i32, i32) {
    %c0_i32 = arith.constant 0 : i32
    %c0_i32_0 = arith.constant 0 : i32
    %c0_i32_1 = arith.constant 0 : i32
    return %c0_i32, %c0_i32_0 : i32, i32
  }
  func.func @transform_1(%arg0: i32, %arg1: i32) -> (i32, i32) {
    %c0_i32 = arith.constant 0 : i32
    %c0_i32_0 = arith.constant 0 : i32
    return %arg0, %c0_i32 : i32, i32
  }
  func.func @transform_2(%arg0: i32, %arg1: i32) -> (i32, i32) {
    %c0_i32 = arith.constant 0 : i32
    %c0_i32_0 = arith.constant 0 : i32
    return %c0_i32, %arg1 : i32, i32
  }
  func.func @transform_3(%arg0: i32, %arg1: i32) -> (i32, i32) {
    %c0_i32 = arith.constant 0 : i32
    %c0_i32_0 = arith.constant 0 : i32
    return %c0_i32, %arg1 : i32, i32
  }
  func.func @transform_4(%arg0: i32, %arg1: i32) -> (i32, i32) {
    %c0_i32 = arith.constant 0 : i32
    %c0_i32_0 = arith.constant 0 : i32
    return %arg1, %c0_i32 : i32, i32
  }
  func.func @transform_5(%arg0: i32, %arg1: i32) -> (i32, i32) {
    %c0_i32 = arith.constant 0 : i32
    %c0_i32_0 = arith.constant 0 : i32
    %c0_i32_1 = arith.constant 0 : i32
    return %c0_i32, %c0_i32_0 : i32, i32
  }
  func.func @transform_6(%arg0: i32, %arg1: i32) -> (i32, i32) {
    %c0_i32 = arith.constant 0 : i32
    %c0_i32_0 = arith.constant 0 : i32
    return %arg0, %c0_i32 : i32, i32
  }
}

</mosaic_0001>

<llo_original>
// kernel: unsupervised_learner_forward.1
$region0: #{unsupervised_learner_forward.1}
  #allocation0 [shape = 'u32[]', space=smem, size = 0x4, offset = 0x4, fixed_abs, tag = 'smem constant byte address 0x4 - core index']
  #allocation1 [shape = 'u32[144,128]{1,0:T(1,128)}', space=vmem, size = 0x12000, scoped, tag = 'internal scratch']
  #allocation2 [shape = 'f32[1,1]{1,0:T(1,128)S(6)}', space=smem, size = 0x200, scoped, tag = 'scoped memory for unsupervised_learner_forward.1']
  %s0 = inlined_call_operand.<no memory space> [shape: f32[1,1], index: 0, kind: input, shape index: {}]
  %s1 = inlined_call_operand.vmem [shape: bf16[16,128], index: 1, kind: input, shape index: {}]
  %s2 = inlined_call_operand.hbm [shape: bf16[128,128], index: 2, kind: input, shape index: {}]
  %s3 = inlined_call_operand.vmem [shape: f32[1,128], index: 3, kind: input, shape index: {}]
  %s4 = inlined_call_operand.hbm [shape: bf16[128,128], index: 4, kind: input, shape index: {}]
  %s5 = inlined_call_operand.vmem [shape: f32[1,128], index: 5, kind: input, shape index: {}]
  %s6 = inlined_call_operand.vmem [shape: f32[16,128], index: 6, kind: output, shape index: {}]
  %s7 = sld [smem:[#allocation0]]
  $region50: #{unsupervised_learner_forward.1} parent=0
    _
  %s9 = ssub.s32 1, %s7
  %s10 = scalar_select 0, %s9, %s7
  %11 = sst [smem:[#allocation2]] %s0
  $region1: #{unsupervised_learner_forward.1} parent=0
    #allocation3 [shape = 'u8[32768]{0}', space=vmem, size = 0x8000, scoped, tag = 'input window, operand 2, single buffered']
    #allocation4 [shape = 's32[1]{0}', space=sflag, size = 0x4, scoped, tag = 'scoped memory for unsupervised_learner_forward.1']
    #allocation5 [shape = 'u8[32768]{0}', space=vmem, size = 0x8000, scoped, tag = 'input window, operand 4, single buffered']
    #allocation6 [shape = 's32[1]{0}', space=sflag, size = 0x4, scoped, tag = 'scoped memory for unsupervised_learner_forward.1']
    %12 = vsyncpa [#allocation4], 0
    %13 = vsyncpa [#allocation6], 0
    // Predicated region
    $region2: #{unsupervised_learner_forward.1} parent=1 // pred_check
      _
    $region3: #{unsupervised_learner_forward.1} parent=1 // pred_check_branch
      %15 = sbr.rel (0) target = $region5
    $region4: #{unsupervised_learner_forward.1} parent=1 // pred_region
      _
    $region5: #{unsupervised_learner_forward.1} parent=1 // pred_fallthru
      _
    // Predicated region
    $region6: #{unsupervised_learner_forward.1} parent=1 // pred_check
      _
    $region7: #{unsupervised_learner_forward.1} parent=1 // pred_check_branch
      %17 = sbr.rel (0) target = $region9
    $region8: #{unsupervised_learner_forward.1} parent=1 // pred_region
      _
    $region9: #{unsupervised_learner_forward.1} parent=1 // pred_fallthru
      _
    // Predicated region
    $region10: #{unsupervised_learner_forward.1} parent=1 // pred_check
      _
    $region11: #{unsupervised_learner_forward.1} parent=1 // pred_check_branch
      %19 = sbr.rel (0) target = $region13
    $region12: #{unsupervised_learner_forward.1} parent=1 // pred_region
      %s21 = ssub.s32 1024, 1024
      %22 = vsyncadd [#allocation4], %s21
      %s23 = sshll.u32 [#allocation3], 4
      %s24 = int_to_ptr.vmem [resolvable:$true] %s23
      %29 = dma.hbm_to_vmem [thread:$0]  %s2, 1024, %s24, [#allocation4], 64, 64, 4
    $region13: #{unsupervised_learner_forward.1} parent=1 // pred_fallthru
      _
    // Predicated region
    $region14: #{unsupervised_learner_forward.1} parent=1 // pred_check
      _
    $region15: #{unsupervised_learner_forward.1} parent=1 // pred_check_branch
      %31 = sbr.rel (0) target = $region17
    $region16: #{unsupervised_learner_forward.1} parent=1 // pred_region
      _
    $region17: #{unsupervised_learner_forward.1} parent=1 // pred_fallthru
      _
    // Predicated region
    $region18: #{unsupervised_learner_forward.1} parent=1 // pred_check
      _
    $region19: #{unsupervised_learner_forward.1} parent=1 // pred_check_branch
      %33 = sbr.rel (0) target = $region21
    $region20: #{unsupervised_learner_forward.1} parent=1 // pred_region
      %s35 = ssub.s32 1024, 1024
      %36 = vsyncadd [#allocation6], %s35
      %s37 = sshll.u32 [#allocation5], 4
      %s38 = int_to_ptr.vmem [resolvable:$true] %s37
      %43 = dma.hbm_to_vmem [thread:$0]  %s4, 1024, %s38, [#allocation6], 64, 64, 4
    $region21: #{unsupervised_learner_forward.1} parent=1 // pred_fallthru
      _
    // Predicated region
    $region22: #{unsupervised_learner_forward.1} parent=1 // pred_check
      _
    $region23: #{unsupervised_learner_forward.1} parent=1 // pred_check_branch
      %45 = sbr.rel (0) target = $region25
    $region24: #{unsupervised_learner_forward.1} parent=1 // pred_region
      _
    $region25: #{unsupervised_learner_forward.1} parent=1 // pred_fallthru
      _
    // Predicated region
    $region26: #{unsupervised_learner_forward.1} parent=1 // pred_check
      _
    $region27: #{unsupervised_learner_forward.1} parent=1 // pred_check_branch
      %47 = sbr.rel (0) target = $region29
    $region28: #{unsupervised_learner_forward.1} parent=1 // pred_region
      %48 = dma.done [#allocation4], 1024
    $region29: #{unsupervised_learner_forward.1} parent=1 // pred_fallthru
      _
    // Predicated region
    $region30: #{unsupervised_learner_forward.1} parent=1 // pred_check
      _
    $region31: #{unsupervised_learner_forward.1} parent=1 // pred_check_branch
      %50 = sbr.rel (0) target = $region33
    $region32: #{unsupervised_learner_forward.1} parent=1 // pred_region
      %51 = dma.done [#allocation6], 1024
    $region33: #{unsupervised_learner_forward.1} parent=1 // pred_fallthru
      _
    %p53 = scmp.eq.s32.totalorder 0, 0
    // Predicated region
    $region34: #{unsupervised_learner_forward.1} parent=1 // pred_check
      %p54 = pneg %p53
    $region35: #{unsupervised_learner_forward.1} parent=1 // pred_check_branch
      %56 = sbr.rel (%p54) target = $region37
    $region36: #{unsupervised_learner_forward.1} parent=1 // pred_region
      %57 = vst [vmem:[%s6] sm:$0xff] 0.0
      %58 = vst [vmem:[%s6 + $0x8] sm:$0xff] 0.0
    $region37: #{unsupervised_learner_forward.1} parent=1 // pred_fallthru
      _
    %v59 = vld [vmem:[%s1] sm:$0xf]
    %v60 = vld [vmem:[%s1 + $0x4] sm:$0xf]
    %v61 = vld [vmem:[#allocation3] sm:$0xf]
    %v62 = vld [vmem:[#allocation3 + $0x4] sm:$0xf]
    %v63 = vld [vmem:[#allocation3 + $0x8] sm:$0xf]
    %v64 = vld [vmem:[#allocation3 + $0xc] sm:$0xf]
    %v65 = vld [vmem:[#allocation3 + $0x10] sm:$0xf]
    %v66 = vld [vmem:[#allocation3 + $0x14] sm:$0xf]
    %v67 = vld [vmem:[#allocation3 + $0x18] sm:$0xf]
    %v68 = vld [vmem:[#allocation3 + $0x1c] sm:$0xf]
    %v69 = vld [vmem:[#allocation3 + $0x20] sm:$0xf]
    %v70 = vld [vmem:[#allocation3 + $0x24] sm:$0xf]
    %v71 = vld [vmem:[#allocation3 + $0x28] sm:$0xf]
    %v72 = vld [vmem:[#allocation3 + $0x2c] sm:$0xf]
    %v73 = vld [vmem:[#allocation3 + $0x30] sm:$0xf]
    %v74 = vld [vmem:[#allocation3 + $0x34] sm:$0xf]
    %v75 = vld [vmem:[#allocation3 + $0x38] sm:$0xf]
    %v76 = vld [vmem:[#allocation3 + $0x3c] sm:$0xf]
    %v77 = vld [vmem:[%s3] sm:$0x1]
    %v79 = vlaneseq
    %v80 = vshrl.u32 %v79, 7
    %v81 = vsub.s32 0, %v80
    %v82 = vrot.slane %v77, %v81
    %v86 = vunpack.c.l.b16 %v59
    %v87 = vunpack.c.l.b16 %v60
    %v88 = vpack.c.b16 %v87, %v86
    %v106 = vunpack.c.l.b16 %v61
    %v107 = vunpack.c.l.b16 %v62
    %v108 = vunpack.c.l.b16 %v63
    %v109 = vunpack.c.l.b16 %v64
    %v110 = vunpack.c.l.b16 %v65
    %v111 = vunpack.c.l.b16 %v66
    %v112 = vunpack.c.l.b16 %v67
    %v113 = vunpack.c.l.b16 %v68
    %v114 = vunpack.c.l.b16 %v69
    %v115 = vunpack.c.l.b16 %v70
    %v116 = vunpack.c.l.b16 %v71
    %v117 = vunpack.c.l.b16 %v72
    %v118 = vunpack.c.l.b16 %v73
    %v119 = vunpack.c.l.b16 %v74
    %v120 = vunpack.c.l.b16 %v75
    %v121 = vunpack.c.l.b16 %v76
    %v122 = vpack.c.b16 %v107, %v106
    %v123 = vpack.c.b16 %v109, %v108
    %v124 = vpack.c.b16 %v111, %v110
    %v125 = vpack.c.b16 %v113, %v112
    %v126 = vpack.c.b16 %v115, %v114
    %v127 = vpack.c.b16 %v117, %v116
    %v128 = vpack.c.b16 %v119, %v118
    %v129 = vpack.c.b16 %v121, %v120
    %138 = vmatprep.subr.bf16.mxu0 0
    %139 = vmatpush1.bf16.msra.mxu0 %v122
    %140 = vmatprep.subr.bf16.mxu0 0
    %141 = vmatpush1.bf16.msra.mxu0 %v123
    %142 = vmatprep.subr.bf16.mxu0 0
    %143 = vmatpush1.bf16.msra.mxu0 %v124
    %144 = vmatprep.subr.bf16.mxu0 0
    %145 = vmatpush1.bf16.msra.mxu0 %v125
    %146 = vmatprep.subr.bf16.mxu0 0
    %147 = vmatpush1.bf16.msra.mxu0 %v126
    %148 = vmatprep.subr.bf16.mxu0 0
    %149 = vmatpush1.bf16.msra.mxu0 %v127
    %150 = vmatprep.subr.bf16.mxu0 0
    %151 = vmatpush1.bf16.msra.mxu0 %v128
    %152 = vmatprep.subr.bf16.mxu0 0
    %153 = vmatpush1.bf16.msra.mxu0 %v129
    %154 = vmatprep.subr.bf16.mxu0 0
    %155 = vmatpush1.bf16.msra.mxu0 0
    %156 = vmatprep.subr.bf16.mxu0 0
    %157 = vmatpush1.bf16.msra.mxu0 0
    %158 = vmatprep.subr.bf16.mxu0 0
    %159 = vmatpush1.bf16.msra.mxu0 0
    %160 = vmatprep.subr.bf16.mxu0 0
    %161 = vmatpush1.bf16.msra.mxu0 0
    %162 = vmatprep.subr.bf16.mxu0 0
    %163 = vmatpush1.bf16.msra.mxu0 0
    %164 = vmatprep.subr.bf16.mxu0 0
    %165 = vmatpush1.bf16.msra.mxu0 0
    %166 = vmatprep.subr.bf16.mxu0 0
    %167 = vmatpush1.bf16.msra.mxu0 0
    %168 = vmatprep.subr.bf16.mxu0 0
    %169 = vmatpush1.bf16.msra.mxu0 0
    %170 = vmatprep.mubr.bf16.mxu0 0
    %171 = vmatmul.mubr.bf16.gmra.mrb[0].mxu0 %v88
    %v172 = vpop.f32.mrb[0].mxu0
    %v173 = vadd.f32 %v82, %v172
    %v174 = vpop.f32.mrb[0].mxu0
    %v175 = vpop.f32.mrb[0].mxu0
    %v176 = vadd.f32 %v82, %v175
    %v177 = vpop.f32.mrb[0].mxu0
    %178 = vdwg.mxu0
    %v179 = vmul.f32 %v173, 0.5
    %v180 = vmul.f32 %v176, 0.5
    %v181 = vmul.f32 %v173, 0.70710677
    %v182 = vmul.f32 %v176, 0.70710677
    %v183 = verf.f32.pop %v181
    %v184 = verf.f32.pop %v182
    %v185 = vadd.f32 %v183, 1.0
    %v186 = vadd.f32 %v184, 1.0
    %v187 = vmul.f32 %v179, %v185
    %v188 = vmul.f32 %v180, %v186
    %v189 = vpack.c.bf16 %v188, %v187
    %v190 = vld [vmem:[#allocation5] sm:$0xf]
    %v191 = vld [vmem:[#allocation5 + $0x4] sm:$0xf]
    %v192 = vld [vmem:[#allocation5 + $0x8] sm:$0xf]
    %v193 = vld [vmem:[#allocation5 + $0xc] sm:$0xf]
    %v194 = vld [vmem:[#allocation5 + $0x10] sm:$0xf]
    %v195 = vld [vmem:[#allocation5 + $0x14] sm:$0xf]
    %v196 = vld [vmem:[#allocation5 + $0x18] sm:$0xf]
    %v197 = vld [vmem:[#allocation5 + $0x1c] sm:$0xf]
    %v198 = vld [vmem:[#allocation5 + $0x20] sm:$0xf]
    %v199 = vld [vmem:[#allocation5 + $0x24] sm:$0xf]
    %v200 = vld [vmem:[#allocation5 + $0x28] sm:$0xf]
    %v201 = vld [vmem:[#allocation5 + $0x2c] sm:$0xf]
    %v202 = vld [vmem:[#allocation5 + $0x30] sm:$0xf]
    %v203 = vld [vmem:[#allocation5 + $0x34] sm:$0xf]
    %v204 = vld [vmem:[#allocation5 + $0x38] sm:$0xf]
    %v205 = vld [vmem:[#allocation5 + $0x3c] sm:$0xf]
    %v222 = vunpack.c.l.b16 %v190
    %v223 = vunpack.c.l.b16 %v191
    %v224 = vunpack.c.l.b16 %v192
    %v225 = vunpack.c.l.b16 %v193
    %v226 = vunpack.c.l.b16 %v194
    %v227 = vunpack.c.l.b16 %v195
    %v228 = vunpack.c.l.b16 %v196
    %v229 = vunpack.c.l.b16 %v197
    %v230 = vunpack.c.l.b16 %v198
    %v231 = vunpack.c.l.b16 %v199
    %v232 = vunpack.c.l.b16 %v200
    %v233 = vunpack.c.l.b16 %v201
    %v234 = vunpack.c.l.b16 %v202
    %v235 = vunpack.c.l.b16 %v203
    %v236 = vunpack.c.l.b16 %v204
    %v237 = vunpack.c.l.b16 %v205
    %v238 = vpack.c.b16 %v223, %v222
    %v239 = vpack.c.b16 %v225, %v224
    %v240 = vpack.c.b16 %v227, %v226
    %v241 = vpack.c.b16 %v229, %v228
    %v242 = vpack.c.b16 %v231, %v230
    %v243 = vpack.c.b16 %v233, %v232
    %v244 = vpack.c.b16 %v235, %v234
    %v245 = vpack.c.b16 %v237, %v236
    %254 = vmatprep.subr.bf16.mxu0 0
    %255 = vmatpush1.bf16.msra.mxu0 %v238
    %256 = vmatprep.subr.bf16.mxu0 0
    %257 = vmatpush1.bf16.msra.mxu0 %v239
    %258 = vmatprep.subr.bf16.mxu0 0
    %259 = vmatpush1.bf16.msra.mxu0 %v240
    %260 = vmatprep.subr.bf16.mxu0 0
    %261 = vmatpush1.bf16.msra.mxu0 %v241
    %262 = vmatprep.subr.bf16.mxu0 0
    %263 = vmatpush1.bf16.msra.mxu0 %v242
    %264 = vmatprep.subr.bf16.mxu0 0
    %265 = vmatpush1.bf16.msra.mxu0 %v243
    %266 = vmatprep.subr.bf16.mxu0 0
    %267 = vmatpush1.bf16.msra.mxu0 %v244
    %268 = vmatprep.subr.bf16.mxu0 0
    %269 = vmatpush1.bf16.msra.mxu0 %v245
    %270 = vmatprep.subr.bf16.mxu0 0
    %271 = vmatpush1.bf16.msra.mxu0 0
    %272 = vmatprep.subr.bf16.mxu0 0
    %273 = vmatpush1.bf16.msra.mxu0 0
    %274 = vmatprep.subr.bf16.mxu0 0
    %275 = vmatpush1.bf16.msra.mxu0 0
    %276 = vmatprep.subr.bf16.mxu0 0
    %277 = vmatpush1.bf16.msra.mxu0 0
    %278 = vmatprep.subr.bf16.mxu0 0
    %279 = vmatpush1.bf16.msra.mxu0 0
    %280 = vmatprep.subr.bf16.mxu0 0
    %281 = vmatpush1.bf16.msra.mxu0 0
    %282 = vmatprep.subr.bf16.mxu0 0
    %283 = vmatpush1.bf16.msra.mxu0 0
    %284 = vmatprep.subr.bf16.mxu0 0
    %285 = vmatpush1.bf16.msra.mxu0 0
    %286 = vmatprep.mubr.bf16.mxu0 0
    %287 = vmatmul.mubr.bf16.gmra.mrb[0].mxu0 %v189
    %v288 = vpop.f32.mrb[0].mxu0
    %v289 = vadd.f32 0.0, %v288
    %v290 = vpop.f32.mrb[0].mxu0
    %v291 = vpop.f32.mrb[0].mxu0
    %v292 = vadd.f32 0.0, %v291
    %v293 = vpop.f32.mrb[0].mxu0
    %294 = vdwg.mxu0
    %v295 = vld [vmem:[%s6] sm:$0xff]
    %v296 = vld [vmem:[%s6 + $0x8] sm:$0xff]
    %v297 = vadd.f32 %v295, %v289
    %v298 = vadd.f32 %v296, %v292
    %299 = vst [vmem:[%s6] sm:$0xff] %v297
    %300 = vst [vmem:[%s6 + $0x8] sm:$0xff] %v298
    // Predicated region
    $region38: #{unsupervised_learner_forward.1} parent=1 // pred_check
      %p301 = pneg %p53
    $region39: #{unsupervised_learner_forward.1} parent=1 // pred_check_branch
      %303 = sbr.rel (%p301) target = $region41
    $region40: #{unsupervised_learner_forward.1} parent=1 // pred_region
      %v304 = vld [vmem:[%s6] sm:$0xff]
      %v305 = vld [vmem:[%s6 + $0x8] sm:$0xff]
      %v306 = vld [vmem:[%s5] sm:$0x1]
      %v308 = vlaneseq
      %v309 = vshrl.u32 %v308, 7
      %v310 = vsub.s32 0, %v309
      %v311 = vrot.slane %v306, %v310
      %v313 = vadd.f32 %v304, %v311
      %v314 = vadd.f32 %v305, %v311
      %s315 = sld [smem:[#allocation2]]
      %v316 = vstv %s315
      %v317 = vmul.f32 %v313, %v316
      %v318 = vmul.f32 %v314, %v316
      %319 = vst [vmem:[%s6] sm:$0xff] %v317
      %320 = vst [vmem:[%s6 + $0x8] sm:$0xff] %v318
    $region41: #{unsupervised_learner_forward.1} parent=1 // pred_fallthru
      _
    // Predicated region
    $region42: #{unsupervised_learner_forward.1} parent=1 // pred_check
      _
    $region43: #{unsupervised_learner_forward.1} parent=1 // pred_check_branch
      %322 = sbr.rel (0) target = $region45
    $region44: #{unsupervised_learner_forward.1} parent=1 // pred_region
      _
    $region45: #{unsupervised_learner_forward.1} parent=1 // pred_fallthru
      _
    // Predicated region
    $region46: #{unsupervised_learner_forward.1} parent=1 // pred_check
      _
    $region47: #{unsupervised_learner_forward.1} parent=1 // pred_check_branch
      %324 = sbr.rel (0) target = $region49
    $region48: #{unsupervised_learner_forward.1} parent=1 // pred_region
      _
    $region49: #{unsupervised_learner_forward.1} parent=1 // pred_fallthru
      _
    %325 = vsyncpa [#allocation4], 1
    %326 = vsyncpa [#allocation6], 1

</llo_original>
